<compile_context>
chip_gen: v6e
topology: v6e:2x2x1
jax: 0.10.0
libtpu: 0.0.40
codegen_flags: <defaults>
</compile_context>

<pallas_src>
import functools

import jax
import jax.numpy as jnp
from jax import lax
from jax.experimental import pallas as pl
from jax.experimental.pallas import tpu as pltpu

# Hyper-parameters (mirror LambdaLayer.__init__ defaults, small spatial size).
DIM = 16                     # C == dim == dim_out
NUM_HEADS = 4
DIM_K = 16                   # dim_head
DIM_V = DIM // NUM_HEADS     # dim_out // num_heads
R = 7                        # local context of conv_lambda
EPS = 1e-5                   # BatchNorm eps
QKV_CH = NUM_HEADS * DIM_K + DIM_K + DIM_V   # 84


def _lambda_kernel(x_ref, w_ref, e_ref, out_ref, *, batch, num_heads, dim_k,
                   dim_v, m):
    f32 = jnp.float32
    nq = num_heads * dim_k
    bm = batch * m

    # Fused qkv projection for all batch elements at once (one MXU matmul with
    # full 128-lane fill).  BN scales are pre-folded into the weight rows; BN
    # biases come via the appended ones-row of x_aug.
    qkv = jnp.dot(w_ref[...], x_ref[...], preferred_element_type=f32)  # (84, B*M)
    q_all = qkv[:nq]                              # (NH*DK, B*M), rows (nh, dk)
    kt = qkv[nq:nq + dim_k]                       # (DK, B*M)
    vt = qkv[nq + dim_k:nq + dim_k + dim_v]       # (DV, B*M)

    # Softmax numerator.  A shared per-row max is a constant shift inside every
    # per-batch softmax group, so the normalized result is unchanged and
    # exp() stays <= 1.
    k_exp = jnp.exp(kt - jnp.max(kt, axis=1, keepdims=True))          # (DK, B*M)

    # Tiny per-batch pieces: v rows for the E matmul and the content lambdas.
    v_rows_list = []
    cl_list = []
    for b in range(batch):
        v_b = vt[:, b * m:(b + 1) * m]            # (DV, M)
        k_b = k_exp[:, b * m:(b + 1) * m]         # (DK, M)
        inv = pl.reciprocal(jnp.sum(k_b, axis=1, keepdims=True),
                            approx=True)          # (DK, 1)
        k_bn = k_b * inv                          # softmax over spatial dim
        cl_b = lax.dot_general(v_b, k_bn, (((1,), (1,)), ((), ())),
                               preferred_element_type=f32)  # (DV, DK)
        v_rows_list.append(v_b)
        cl_list.append(cl_b)

    # (B*DV, M) rows ordered (b, dv); ones column pairs with the conv-bias row
    # appended to E so the Conv3d bias is absorbed by the same MXU matmul.
    v_rows = jnp.concatenate(v_rows_list, axis=0)                       # (B*DV, M)
    v_rows_aug = jnp.concatenate(
        [v_rows, jnp.ones((batch * dim_v, 1), f32)], axis=1)            # (B*DV, M+1)

    # One batched MXU matmul for ALL position lambdas (+ conv bias).
    pos = jnp.dot(v_rows_aug, e_ref[...],
                  preferred_element_type=f32)                           # (B*DV, DK*M)
    pos3 = pos.reshape(batch * dim_v, dim_k, m)                         # (B*DV, DK, M)

    # Total lambda in the (dv, dk, (b, m)) frame; content lambda folded in so a
    # single lane-dense contraction produces content + position output.
    lam = jnp.concatenate(
        [pos3[b * dim_v:(b + 1) * dim_v] + cl_list[b][:, :, None]
         for b in range(batch)],
        axis=2)                                                         # (DV, DK, B*M)

    # Final contraction over dk: DK on sublanes, B*M = 128 dense lanes.
    q_r = q_all.reshape(num_heads, dim_k, bm)                           # (NH, DK, B*M)
    out = jnp.sum(lam[:, None, :, :] * q_r[None, :, :, :], axis=2)      # (DV, NH, B*M)

    # Single unmasked full-tile store.
    out_ref[...] = out.reshape(dim_v * num_heads, bm).astype(out_ref.dtype)


def bn_fold(gamma, beta, mean, var):
    scale = gamma / jnp.sqrt(var + EPS)
    bias = beta - mean * scale
    return scale, bias


def build_position_matrix(w_conv2d, conv_bias, H, W, r):
    """w_conv2d: (DK, r, r) spatial filters of the Conv3d (r, r, 1) kernel.

    Returns E_aug of shape (M+1, DK*M) with
      E_aug[m', dk*M + m] = w_conv2d[dk, h'-h+p, w'-w+p]  (0 when out of range)
      E_aug[M,  dk*M + m] = conv_bias[dk]
    so that (v_rows | 1) @ E_aug equals the conv_lambda output (+ bias)."""
    p = r // 2
    dk = w_conv2d.shape[0]
    M = H * W
    hh = jnp.arange(H)
    ww = jnp.arange(W)
    di = hh[None, :] - hh[:, None] + p                                  # (H, H')
    dj = ww[None, :] - ww[:, None] + p                                  # (W, W')
    valid = (((di >= 0) & (di < r))[:, None, :, None]
             & ((dj >= 0) & (dj < r))[None, :, None, :])                # (H, W, H', W')
    di_c = jnp.clip(di, 0, r - 1)
    dj_c = jnp.clip(dj, 0, r - 1)
    E = w_conv2d[:, di_c[:, None, :, None], dj_c[None, :, None, :]]     # (DK, H, W, H', W')
    E = E * valid[None].astype(w_conv2d.dtype)
    E = E.reshape(dk, M, M)                                             # (DK, m, m')
    E_t = E.transpose(2, 0, 1).reshape(M, dk * M)                       # (M', DK*M)
    bias_row = jnp.repeat(conv_bias, M)[None, :]                        # (1, DK*M)
    return jnp.concatenate([E_t, bias_row], axis=0)                     # (M+1, DK*M)


def prepare_lambda_params(w_qkv, q_scale, q_bias, v_scale, v_bias, w_conv,
                          conv_bias, H, W):
    """Weight-only preprocessing.  Call ONCE per weight set and cache the result
    (hoisted out of the per-forward path per the perf review)."""
    M = H * W
    nq = NUM_HEADS * DIM_K
    w = w_qkv[:, :, 0, 0]                                               # (84, C)
    w_q = w[:nq] * q_scale[:, None]                                     # BN scale folded
    w_k = w[nq:nq + DIM_K]
    w_v = w[nq + DIM_K:] * v_scale[:, None]
    w_left = jnp.concatenate([w_q, w_k, w_v], axis=0)                   # (84, C)
    b_col = jnp.concatenate(
        [q_bias, jnp.zeros((DIM_K,), w.dtype), v_bias])[:, None]        # (84, 1)
    w_aug = jnp.concatenate([w_left, b_col], axis=1)                    # (84, C+1)

    e_aug = build_position_matrix(w_conv[:, 0, :, :, 0], conv_bias, H, W, R)

    # Dense relative-position matrix is O(DK*M^2) bytes; with grid=(1,) it is
    # double-buffered by BlockSpec.  Guard (conservative for all generations;
    # v7x scoped default is 32 MiB of 64 MiB physical VMEM).
    assert 2 * (M + 1) * DIM_K * M * 4 <= 16 * 1024 * 1024, "dense E too large; tile it"
    return w_aug, e_aug


@jax.jit
def lambda_layer_forward(x_nchw, w_aug, e_aug):
    B, C, H, W = x_nchw.shape
    M = H * W
    assert C == DIM
    assert B * M % 128 == 0, "expect lane-dense B*M (multiple of 128)"

    # Tiny (8 KiB) wrapper-side transpose into the fused (C, B*M) layout, plus
    # the ones row carrying the folded BN biases.
    x_cbm = x_nchw.reshape(B, C, M).transpose(1, 0, 2).reshape(C, B * M)
    x_aug = jnp.concatenate([x_cbm, jnp.ones((1, B * M), x_cbm.dtype)], axis=0)

    kernel = functools.partial(_lambda_kernel, batch=B, num_heads=NUM_HEADS,
                               dim_k=DIM_K, dim_v=DIM_V, m=M)
    out_k = pl.pallas_call(
        kernel,
        out_shape=jax.ShapeDtypeStruct((DIM_V * NUM_HEADS, B * M), jnp.float32),
        grid_spec=pltpu.PrefetchScalarGridSpec(
            num_scalar_prefetch=0,
            # Whole (tiny) problem in one grid step: no per-step overhead and the
            # projection / E matmuls stay batched over B.
            grid=(1,),
            in_specs=[
                pl.BlockSpec((C + 1, B * M), lambda i: (0, 0)),
                pl.BlockSpec((QKV_CH, C + 1), lambda i: (0, 0)),
                pl.BlockSpec((M + 1, DIM_K * M), lambda i: (0, 0)),
            ],
            out_specs=pl.BlockSpec((DIM_V * NUM_HEADS, B * M), lambda i: (0, 0)),
        ),
        compiler_params=pltpu.CompilerParams(
            dimension_semantics=("arbitrary",)),
    )(x_aug, w_aug, e_aug)

    # out_k[(dv, nh), (b, m)] -> torch's (B, DV, M, NH) -> (B, C, H, W).
    # self.pool is nn.Identity() for the default stride=1.
    out = out_k.reshape(DIM_V, NUM_HEADS, B, M).transpose(2, 0, 3, 1)
    return out.reshape(B, C, H, W).astype(x_nchw.dtype)


def reference_forward(x, w_qkv, q_scale, q_bias, v_scale, v_bias, w_conv, conv_bias):
    """Pure-JAX mirror of the PyTorch forward (eval-mode BN), for validation."""
    hp = jax.lax.Precision.HIGHEST
    B, C, H, W = x.shape
    M = H * W
    nhdk = NUM_HEADS * DIM_K
    qkv = jnp.einsum('bchw,oc->bohw', x, w_qkv[:, :, 0, 0], precision=hp)
    q = qkv[:, :nhdk]
    k = qkv[:, nhdk:nhdk + DIM_K]
    v = qkv[:, nhdk + DIM_K:]
    q = q * q_scale[None, :, None, None] + q_bias[None, :, None, None]
    v = v * v_scale[None, :, None, None] + v_bias[None, :, None, None]
    q = q.reshape(B, NUM_HEADS, DIM_K, M).transpose(0, 1, 3, 2)         # (B, NH, M, DK)
    vf = v.reshape(B, DIM_V, M).transpose(0, 2, 1)                      # (B, M, DV)
    k = jax.nn.softmax(k.reshape(B, DIM_K, M), axis=-1)
    content_lam = jnp.einsum('bkm,bmv->bkv', k, vf, precision=hp)
    content_out = jnp.einsum('bhmk,bkv->bhmv', q, content_lam, precision=hp)
    # conv_lambda == 2D cross-correlation over (H, W), 1 -> DK channels, per dv channel.
    v_img = vf.reshape(B, H, W, DIM_V).transpose(0, 3, 1, 2).reshape(B * DIM_V, 1, H, W)
    pos = jax.lax.conv_general_dilated(
        v_img, w_conv[:, :, :, :, 0], window_strides=(1, 1),
        padding=[(R // 2, R // 2), (R // 2, R // 2)],
        dimension_numbers=('NCHW', 'OIHW', 'NCHW'), precision=hp)       # (B*DV, DK, H, W)
    pos = pos + conv_bias[None, :, None, None]
    pos_lam = pos.reshape(B, DIM_V, DIM_K, M).transpose(0, 3, 2, 1)     # (B, M, DK, DV)
    position_out = jnp.einsum('bhmk,bmkv->bhmv', q, pos_lam, precision=hp)
    out = content_out + position_out                                    # (B, NH, M, DV)
    return out.transpose(0, 3, 2, 1).reshape(B, C, H, W)


if __name__ == "__main__":
    B, H, W = 2, 8, 8

    key = jax.random.PRNGKey(0)
    keys = jax.random.split(key, 12)
    x = jax.random.normal(keys[0], (B, DIM, H, W), jnp.float32)

    # Parameters (shapes follow the module's __init__; deterministic values).
    w_qkv = jax.random.normal(keys[1], (QKV_CH, DIM, 1, 1), jnp.float32) / jnp.sqrt(DIM)
    q_gamma = 1.0 + 0.1 * jax.random.normal(keys[2], (NUM_HEADS * DIM_K,), jnp.float32)
    q_beta = 0.1 * jax.random.normal(keys[3], (NUM_HEADS * DIM_K,), jnp.float32)
    q_mean = 0.1 * jax.random.normal(keys[4], (NUM_HEADS * DIM_K,), jnp.float32)
    q_var = jax.random.uniform(keys[5], (NUM_HEADS * DIM_K,), jnp.float32, 0.5, 1.5)
    v_gamma = 1.0 + 0.1 * jax.random.normal(keys[6], (DIM_V,), jnp.float32)
    v_beta = 0.1 * jax.random.normal(keys[7], (DIM_V,), jnp.float32)
    v_mean = 0.1 * jax.random.normal(keys[8], (DIM_V,), jnp.float32)
    v_var = jax.random.uniform(keys[9], (DIM_V,), jnp.float32, 0.5, 1.5)
    w_conv = jax.random.normal(keys[10], (DIM_K, 1, R, R, 1), jnp.float32) / R
    conv_bias = 0.1 * jax.random.normal(keys[11], (DIM_K,), jnp.float32)

    q_scale, q_bias = bn_fold(q_gamma, q_beta, q_mean, q_var)
    v_scale, v_bias = bn_fold(v_gamma, v_beta, v_mean, v_var)

    # Weight-only preprocessing: done ONCE, outside the per-forward path.
    w_aug, e_aug = prepare_lambda_params(w_qkv, q_scale, q_bias, v_scale, v_bias,
                                         w_conv, conv_bias, H, W)

    out = lambda_layer_forward(x, w_aug, e_aug)
    out = jax.block_until_ready(out)

    ref = reference_forward(x, w_qkv, q_scale, q_bias, v_scale, v_bias,
                            w_conv, conv_bias)
    assert out.shape == (B, DIM, H, W)
    max_err = float(jnp.max(jnp.abs(out - ref)))
    assert jnp.allclose(out, ref, atol=2e-2, rtol=2e-2), f"max abs err {max_err}"
    print("KERNEL_OK")
</pallas_src>

<mosaic_0001>
module attributes {stable_mosaic.version = 11 : i64} {
  func.func @_lambda_kernel(%arg0: i32, %arg1: memref<17x128xf32, #tpu.memory_space<vmem>>, %arg2: memref<84x17xf32, #tpu.memory_space<vmem>>, %arg3: memref<65x1024xf32, #tpu.memory_space<vmem>>, %arg4: memref<16x128xf32, #tpu.memory_space<vmem>>) attributes {dimension_semantics = [#tpu.dimension_semantics<arbitrary>], iteration_bounds = array<i64: 1>, scalar_prefetch = 0 : i64, scratch_operands = 0 : i64, tpu.core_type = #tpu.core_type<tc>, window_params = [{pipeline_mode = #tpu.pipeline_mode<synchronous>, transform_indices = @transform_0, window_bounds = array<i64: 17, 128>}, {pipeline_mode = #tpu.pipeline_mode<synchronous>, transform_indices = @transform_1, window_bounds = array<i64: 84, 17>}, {pipeline_mode = #tpu.pipeline_mode<synchronous>, transform_indices = @transform_2, window_bounds = array<i64: 65, 1024>}, {pipeline_mode = #tpu.pipeline_mode<synchronous>, transform_indices = @transform_3, window_bounds = array<i64: 16, 128>}]} {
    %c0 = arith.constant 0 : index
    %c0_0 = arith.constant 0 : index
    %0 = vector.load %arg2[%c0, %c0_0] : memref<84x17xf32, #tpu.memory_space<vmem>>, vector<84x17xf32>
    %c0_1 = arith.constant 0 : index
    %c0_2 = arith.constant 0 : index
    %1 = vector.load %arg1[%c0_1, %c0_2] : memref<17x128xf32, #tpu.memory_space<vmem>>, vector<17x128xf32>
    %cst = arith.constant dense<0.000000e+00> : vector<84x128xf32>
    %2 = tpu.matmul %0, %1, %cst {dimension_numbers = #tpu.dot_dimension_numbers<[1], [0], [0], [1], [0, 0, 1, 1], [], []>} : vector<84x17xf32>, vector<17x128xf32>, vector<84x128xf32> -> vector<84x128xf32>
    %3 = vector.extract_strided_slice %2 {offsets = [0, 0], sizes = [64, 128], strides = [1, 1]} : vector<84x128xf32> to vector<64x128xf32>
    %4 = vector.extract_strided_slice %2 {offsets = [64, 0], sizes = [16, 128], strides = [1, 1]} : vector<84x128xf32> to vector<16x128xf32>
    %5 = vector.extract_strided_slice %2 {offsets = [80, 0], sizes = [4, 128], strides = [1, 1]} : vector<84x128xf32> to vector<4x128xf32>
    %cst_3 = arith.constant dense<0xFF800000> : vector<16xf32>
    %6 = vector.multi_reduction <maximumf>, %4, %cst_3 [1] : vector<16x128xf32> to vector<16xf32>
    %7 = vector.shape_cast %6 : vector<16xf32> to vector<16x1xf32>
    %8 = vector.broadcast %7 : vector<16x1xf32> to vector<16x128xf32>
    %9 = arith.subf %4, %8 : vector<16x128xf32>
    %10 = math.exp %9 : vector<16x128xf32>
    %11 = vector.extract_strided_slice %5 {offsets = [0, 0], sizes = [4, 64], strides = [1, 1]} : vector<4x128xf32> to vector<4x64xf32>
    %12 = vector.extract_strided_slice %10 {offsets = [0, 0], sizes = [16, 64], strides = [1, 1]} : vector<16x128xf32> to vector<16x64xf32>
    %cst_4 = arith.constant dense<0.000000e+00> : vector<16xf32>
    %13 = vector.multi_reduction <add>, %12, %cst_4 [1] : vector<16x64xf32> to vector<16xf32>
    %14 = vector.shape_cast %13 : vector<16xf32> to vector<16x1xf32>
    %15 = tpu.reciprocal %14 {approx = true} : vector<16x1xf32> -> vector<16x1xf32>
    %16 = vector.broadcast %15 : vector<16x1xf32> to vector<16x64xf32>
    %17 = arith.mulf %12, %16 : vector<16x64xf32>
    %cst_5 = arith.constant dense<0.000000e+00> : vector<4x16xf32>
    %18 = tpu.matmul %11, %17, %cst_5 {dimension_numbers = #tpu.dot_dimension_numbers<[1], [1], [0], [0], [0, 0, 1, 0], [], []>} : vector<4x64xf32>, vector<16x64xf32>, vector<4x16xf32> -> vector<4x16xf32>
    %19 = vector.extract_strided_slice %5 {offsets = [0, 64], sizes = [4, 64], strides = [1, 1]} : vector<4x128xf32> to vector<4x64xf32>
    %20 = vector.extract_strided_slice %10 {offsets = [0, 64], sizes = [16, 64], strides = [1, 1]} : vector<16x128xf32> to vector<16x64xf32>
    %cst_6 = arith.constant dense<0.000000e+00> : vector<16xf32>
    %21 = vector.multi_reduction <add>, %20, %cst_6 [1] : vector<16x64xf32> to vector<16xf32>
    %22 = vector.shape_cast %21 : vector<16xf32> to vector<16x1xf32>
    %23 = tpu.reciprocal %22 {approx = true} : vector<16x1xf32> -> vector<16x1xf32>
    %24 = vector.broadcast %23 : vector<16x1xf32> to vector<16x64xf32>
    %25 = arith.mulf %20, %24 : vector<16x64xf32>
    %cst_7 = arith.constant dense<0.000000e+00> : vector<4x16xf32>
    %26 = tpu.matmul %19, %25, %cst_7 {dimension_numbers = #tpu.dot_dimension_numbers<[1], [1], [0], [0], [0, 0, 1, 0], [], []>} : vector<4x64xf32>, vector<16x64xf32>, vector<4x16xf32> -> vector<4x16xf32>
    %27 = tpu.concatenate %11, %19 in 0 : vector<4x64xf32>, vector<4x64xf32> -> vector<8x64xf32>
    %cst_8 = arith.constant 1.000000e+00 : f32
    %28 = vector.broadcast %cst_8 : f32 to vector<8x1xf32>
    %29 = tpu.concatenate %27, %28 in 1 : vector<8x64xf32>, vector<8x1xf32> -> vector<8x65xf32>
    %c0_9 = arith.constant 0 : index
    %c0_10 = arith.constant 0 : index
    %30 = vector.load %arg3[%c0_9, %c0_10] : memref<65x1024xf32, #tpu.memory_space<vmem>>, vector<65x1024xf32>
    %cst_11 = arith.constant dense<0.000000e+00> : vector<8x1024xf32>
    %31 = tpu.matmul %29, %30, %cst_11 {dimension_numbers = #tpu.dot_dimension_numbers<[1], [0], [0], [1], [0, 0, 1, 1], [], []>} : vector<8x65xf32>, vector<65x1024xf32>, vector<8x1024xf32> -> vector<8x1024xf32>
    %32 = vector.shape_cast %31 : vector<8x1024xf32> to vector<8x16x64xf32>
    %33 = vector.extract_strided_slice %32 {offsets = [0, 0, 0], sizes = [4, 16, 64], strides = [1, 1, 1]} : vector<8x16x64xf32> to vector<4x16x64xf32>
    %34 = vector.shape_cast %18 : vector<4x16xf32> to vector<4x16x1xf32>
    %35 = vector.broadcast %34 : vector<4x16x1xf32> to vector<4x16x64xf32>
    %36 = arith.addf %33, %35 : vector<4x16x64xf32>
    %37 = vector.extract_strided_slice %32 {offsets = [4, 0, 0], sizes = [4, 16, 64], strides = [1, 1, 1]} : vector<8x16x64xf32> to vector<4x16x64xf32>
    %38 = vector.shape_cast %26 : vector<4x16xf32> to vector<4x16x1xf32>
    %39 = vector.broadcast %38 : vector<4x16x1xf32> to vector<4x16x64xf32>
    %40 = arith.addf %37, %39 : vector<4x16x64xf32>
    %41 = tpu.concatenate %36, %40 in 2 : vector<4x16x64xf32>, vector<4x16x64xf32> -> vector<4x16x128xf32>
    %42 = vector.shape_cast %3 : vector<64x128xf32> to vector<4x16x128xf32>
    %43 = vector.shape_cast %41 : vector<4x16x128xf32> to vector<4x1x16x128xf32>
    %44 = vector.shape_cast %42 : vector<4x16x128xf32> to vector<1x4x16x128xf32>
    %45 = vector.broadcast %43 : vector<4x1x16x128xf32> to vector<4x4x16x128xf32>
    %46 = vector.broadcast %44 : vector<1x4x16x128xf32> to vector<4x4x16x128xf32>
    %47 = arith.mulf %45, %46 : vector<4x4x16x128xf32>
    %cst_12 = arith.constant dense<0.000000e+00> : vector<4x4x128xf32>
    %48 = vector.multi_reduction <add>, %47, %cst_12 [2] : vector<4x4x16x128xf32> to vector<4x4x128xf32>
    %49 = vector.shape_cast %48 : vector<4x4x128xf32> to vector<16x128xf32>
    %c0_13 = arith.constant 0 : index
    %c0_14 = arith.constant 0 : index
    %50 = vector.load %arg4[%c0_13, %c0_14] : memref<16x128xf32, #tpu.memory_space<vmem>>, vector<16x128xf32>
    tpu.vector_store %arg4[%c0_13, %c0_14], %49 {strides = array<i32>} : memref<16x128xf32, #tpu.memory_space<vmem>>, vector<16x128xf32>,
    return
  }
  func.func @transform_0(%arg0: i32) -> (i32, i32) {
    %c0_i32 = arith.constant 0 : i32
    %c0_i32_0 = arith.constant 0 : i32
    %c0_i32_1 = arith.constant 0 : i32
    return %c0_i32, %c0_i32_0 : i32, i32
  }
  func.func @transform_1(%arg0: i32) -> (i32, i32) {
    %c0_i32 = arith.constant 0 : i32
    %c0_i32_0 = arith.constant 0 : i32
    %c0_i32_1 = arith.constant 0 : i32
    return %c0_i32, %c0_i32_0 : i32, i32
  }
  func.func @transform_2(%arg0: i32) -> (i32, i32) {
    %c0_i32 = arith.constant 0 : i32
    %c0_i32_0 = arith.constant 0 : i32
    %c0_i32_1 = arith.constant 0 : i32
    return %c0_i32, %c0_i32_0 : i32, i32
  }
  func.func @transform_3(%arg0: i32) -> (i32, i32) {
    %c0_i32 = arith.constant 0 : i32
    %c0_i32_0 = arith.constant 0 : i32
    %c0_i32_1 = arith.constant 0 : i32
    return %c0_i32, %c0_i32_0 : i32, i32
  }
}

</mosaic_0001>

<llo_original>
// kernel: lambda_layer_forward.1
$region0: #{lambda_layer_forward.1}
  #allocation0 [shape = 'u32[]', space=smem, size = 0x4, offset = 0x4, fixed_abs, tag = 'smem constant byte address 0x4 - core index']
  #allocation1 [shape = 'u32[144,128]{1,0:T(1,128)}', space=vmem, size = 0x12000, scoped, tag = 'internal scratch']
  %s0 = inlined_call_operand.vmem [shape: f32[17,128], index: 0, kind: input, shape index: {}]
  %s1 = inlined_call_operand.vmem [shape: f32[84,17], index: 1, kind: input, shape index: {}]
  %s2 = inlined_call_operand.hbm [shape: f32[65,1024], index: 2, kind: input, shape index: {}]
  %s3 = inlined_call_operand.vmem [shape: f32[16,128], index: 3, kind: output, shape index: {}]
  %s4 = sld [smem:[#allocation0]]
  $region26: #{lambda_layer_forward.1} parent=0
    _
  %s6 = ssub.s32 1, %s4
  %s7 = scalar_select 0, %s6, %s4
  $region1: #{lambda_layer_forward.1} parent=0
    #allocation2 [shape = 'u8[294912]{0}', space=vmem, size = 0x48000, scoped, tag = 'input window, operand 2, single buffered']
    #allocation3 [shape = 's32[1]{0}', space=sflag, size = 0x4, scoped, tag = 'scoped memory for lambda_layer_forward.1']
    %8 = vsyncpa [#allocation3], 0
    // Predicated region
    $region2: #{lambda_layer_forward.1} parent=1 // pred_check
      _
    $region3: #{lambda_layer_forward.1} parent=1 // pred_check_branch
      %10 = sbr.rel (0) target = $region5
    $region4: #{lambda_layer_forward.1} parent=1 // pred_region
      _
    $region5: #{lambda_layer_forward.1} parent=1 // pred_fallthru
      _
    // Predicated region
    $region6: #{lambda_layer_forward.1} parent=1 // pred_check
      _
    $region7: #{lambda_layer_forward.1} parent=1 // pred_check_branch
      %12 = sbr.rel (0) target = $region9
    $region8: #{lambda_layer_forward.1} parent=1 // pred_region
      _
    $region9: #{lambda_layer_forward.1} parent=1 // pred_fallthru
      _
    // Predicated region
    $region10: #{lambda_layer_forward.1} parent=1 // pred_check
      _
    $region11: #{lambda_layer_forward.1} parent=1 // pred_check_branch
      %14 = sbr.rel (0) target = $region13
    $region12: #{lambda_layer_forward.1} parent=1 // pred_region
      %s16 = ssub.s32 9216, 9216
      %17 = vsyncadd [#allocation3], %s16
      %s18 = sshll.u32 [#allocation2], 4
      %s19 = int_to_ptr.vmem [resolvable:$true] %s18
      %24 = dma.hbm_to_vmem [thread:$0]  %s2, 9216, %s19, [#allocation3], 1024, 1024, 64
    $region13: #{lambda_layer_forward.1} parent=1 // pred_fallthru
      _
    // Predicated region
    $region14: #{lambda_layer_forward.1} parent=1 // pred_check
      _
    $region15: #{lambda_layer_forward.1} parent=1 // pred_check_branch
      %26 = sbr.rel (0) target = $region17
    $region16: #{lambda_layer_forward.1} parent=1 // pred_region
      %27 = dma.done [#allocation3], 9216
    $region17: #{lambda_layer_forward.1} parent=1 // pred_fallthru
      _
    %v28 = vld [vmem:[%s1] sm:$0xff]
    %v29 = vld [vmem:[%s1 + $0x8] sm:$0xff]
    %v30 = vld [vmem:[%s1 + $0x10] sm:$0xff]
    %v31 = vld [vmem:[%s1 + $0x18] sm:$0xff]
    %v32 = vld [vmem:[%s1 + $0x20] sm:$0xff]
    %v33 = vld [vmem:[%s1 + $0x28] sm:$0xff]
    %v34 = vld [vmem:[%s1 + $0x30] sm:$0xff]
    %v35 = vld [vmem:[%s1 + $0x38] sm:$0xff]
    %v36 = vld [vmem:[%s1 + $0x40] sm:$0xff]
    %v37 = vld [vmem:[%s1 + $0x48] sm:$0xff]
    %v38 = vld [vmem:[%s1 + $0x50] sm:$0xf]
    %v39 = vld [vmem:[%s0] sm:$0xff]
    %v40 = vld [vmem:[%s0 + $0x8] sm:$0xff]
    %v41 = vld [vmem:[%s0 + $0x10] sm:$0x1]
    %vm42 = vcmask 138240
    %v44 = vsel %vm42, %v28, 0
    %v47 = vsel %vm42, %v29, 0
    %v50 = vsel %vm42, %v30, 0
    %v53 = vsel %vm42, %v31, 0
    %v56 = vsel %vm42, %v32, 0
    %v59 = vsel %vm42, %v33, 0
    %v62 = vsel %vm42, %v34, 0
    %v65 = vsel %vm42, %v35, 0
    %v68 = vsel %vm42, %v36, 0
    %v71 = vsel %vm42, %v37, 0
    %v74 = vsel %vm42, %v38, 0
    %vm76 = vcmask 1040384
    %v78 = vsel %vm76, %v41, 0
    %80 = vmatprep.subr.mxu0 0.0
    %81 = vmatpush1.msra.mxu0 0.0
    %82 = vmatprep.subr.mxu0 0.0
    %83 = vmatpush1.msra.mxu0 0.0
    %84 = vmatprep.subr.mxu0 0.0
    %85 = vmatpush1.msra.mxu0 0.0
    %86 = vmatprep.subr.mxu0 0.0
    %87 = vmatpush1.msra.mxu0 0.0
    %88 = vmatprep.subr.mxu0 0.0
    %89 = vmatpush1.msra.mxu0 0.0
    %90 = vmatprep.subr.mxu0 0.0
    %91 = vmatpush1.msra.mxu0 0.0
    %92 = vmatprep.subr.mxu0 0.0
    %93 = vmatpush1.msra.mxu0 0.0
    %94 = vmatprep.subr.mxu0 0.0
    %95 = vmatpush1.msra.mxu0 0.0
    %96 = vmatprep.subr.mxu0 0.0
    %97 = vmatpush1.msra.mxu0 0.0
    %98 = vmatprep.subr.mxu0 0.0
    %99 = vmatpush1.msra.mxu0 0.0
    %100 = vmatprep.subr.mxu0 0.0
    %101 = vmatpush1.msra.mxu0 0.0
    %102 = vmatprep.subr.mxu0 0.0
    %103 = vmatpush1.msra.mxu0 0.0
    %104 = vmatprep.subr.mxu0 0.0
    %105 = vmatpush1.msra.mxu0 0.0
    %106 = vmatprep.subr.mxu0 0.0
    %107 = vmatpush1.msra.mxu0 %v78
    %108 = vmatprep.subr.mxu0 0.0
    %109 = vmatpush1.msra.mxu0 %v40
    %110 = vmatprep.subr.mxu0 0.0
    %111 = vmatpush1.msra.mxu0 %v39
    %112 = vmatprep.subr.mxu0 0.0
    %113 = vmatpush2.msra.mxu0 0.0
    %114 = vmatprep.subr.mxu0 0.0
    %115 = vmatpush2.msra.mxu0 0.0
    %116 = vmatprep.subr.mxu0 0.0
    %117 = vmatpush2.msra.mxu0 0.0
    %118 = vmatprep.subr.mxu0 0.0
    %119 = vmatpush2.msra.mxu0 0.0
    %120 = vmatprep.subr.mxu0 0.0
    %121 = vmatpush2.msra.mxu0 0.0
    %122 = vmatprep.subr.mxu0 0.0
    %123 = vmatpush2.msra.mxu0 0.0
    %124 = vmatprep.subr.mxu0 0.0
    %125 = vmatpush2.msra.mxu0 0.0
    %126 = vmatprep.subr.mxu0 0.0
    %127 = vmatpush2.msra.mxu0 0.0
    %128 = vmatprep.subr.mxu0 0.0
    %129 = vmatpush2.msra.mxu0 0.0
    %130 = vmatprep.subr.mxu0 0.0
    %131 = vmatpush2.msra.mxu0 0.0
    %132 = vmatprep.subr.mxu0 0.0
    %133 = vmatpush2.msra.mxu0 0.0
    %134 = vmatprep.subr.mxu0 0.0
    %135 = vmatpush2.msra.mxu0 0.0
    %136 = vmatprep.subr.mxu0 0.0
    %137 = vmatpush2.msra.mxu0 0.0
    %138 = vmatprep.subr.mxu0 0.0
    %139 = vmatpush2.msra.mxu0 0.0
    %140 = vmatprep.subr.mxu0 0.0
    %141 = vmatpush2.msra.mxu0 0.0
    %142 = vmatprep.subr.mxu0 0.0
    %143 = vmatpush2.msra.mxu0 0.0
    %144 = vmatprep.mubr.f32.mxu0 0.0
    %145 = vmatmul.mubr.f32.gmra.mxu0 %v44
    %v146 = vpop.f32.mrf.mxu0
    %v147 = vadd.f32 0.0, %v146
    %v148 = vpop.f32.mrf.mxu0
    %149 = vmatprep.mubr.f32.mxu0 0.0
    %150 = vmatmul.mubr.f32.gmra.mxu0 %v47
    %v151 = vpop.f32.mrf.mxu0
    %v152 = vadd.f32 0.0, %v151
    %v153 = vpop.f32.mrf.mxu0
    %154 = vmatprep.mubr.f32.mxu0 0.0
    %155 = vmatmul.mubr.f32.gmra.mxu0 %v50
    %v156 = vpop.f32.mrf.mxu0
    %v157 = vadd.f32 0.0, %v156
    %v158 = vpop.f32.mrf.mxu0
    %159 = vmatprep.mubr.f32.mxu0 0.0
    %160 = vmatmul.mubr.f32.gmra.mxu0 %v53
    %v161 = vpop.f32.mrf.mxu0
    %v162 = vadd.f32 0.0, %v161
    %v163 = vpop.f32.mrf.mxu0
    %164 = vmatprep.mubr.f32.mxu0 0.0
    %165 = vmatmul.mubr.f32.gmra.mxu0 %v56
    %v166 = vpop.f32.mrf.mxu0
    %v167 = vadd.f32 0.0, %v166
    %v168 = vpop.f32.mrf.mxu0
    %169 = vmatprep.mubr.f32.mxu0 0.0
    %170 = vmatmul.mubr.f32.gmra.mxu0 %v59
    %v171 = vpop.f32.mrf.mxu0
    %v172 = vadd.f32 0.0, %v171
    %v173 = vpop.f32.mrf.mxu0
    %174 = vmatprep.mubr.f32.mxu0 0.0
    %175 = vmatmul.mubr.f32.gmra.mxu0 %v62
    %v176 = vpop.f32.mrf.mxu0
    %v177 = vadd.f32 0.0, %v176
    %v178 = vpop.f32.mrf.mxu0
    %179 = vmatprep.mubr.f32.mxu0 0.0
    %180 = vmatmul.mubr.f32.gmra.mxu0 %v65
    %v181 = vpop.f32.mrf.mxu0
    %v182 = vadd.f32 0.0, %v181
    %v183 = vpop.f32.mrf.mxu0
    %184 = vmatprep.mubr.f32.mxu0 0.0
    %185 = vmatmul.mubr.f32.gmra.mxu0 %v68
    %v186 = vpop.f32.mrf.mxu0
    %v187 = vadd.f32 0.0, %v186
    %v188 = vpop.f32.mrf.mxu0
    %189 = vmatprep.mubr.f32.mxu0 0.0
    %190 = vmatmul.mubr.f32.gmra.mxu0 %v71
    %v191 = vpop.f32.mrf.mxu0
    %v192 = vadd.f32 0.0, %v191
    %v193 = vpop.f32.mrf.mxu0
    %194 = vmatprep.mubr.f32.mxu0 0.0
    %195 = vmatmul.mubr.f32.gmra.mxu0 %v74
    %v196 = vpop.f32.mrf.mxu0
    %v197 = vadd.f32 0.0, %v196
    %v198 = vpop.f32.mrf.mxu0
    %199 = vdwg.mxu0
    %200 = vmax.xlane.f32.xlu0 %v187
    %v201 = vpop.xlane.xlu0 %200
    %202 = vmax.xlane.f32.xlu0 %v192
    %v203 = vpop.xlane.xlu0 %202
    %v204 = vsub.f32 %v187, %v201
    %v205 = vsub.f32 %v192, %v203
    %v206 = vmul.f32 %v204, 1.442695
    %v207 = vpow.pop %v206
    %v208 = vmul.f32 %v205, 1.442695
    %v209 = vpow.pop %v208
    %vm210 = vcmask 523264
    %v211 = vsel %vm210, %v207, 0.0
    %212 = vadd.xlane.f32.xlu0 %v211
    %v213 = vpop.xlane.xlu0 %212
    %v214 = vsel %vm210, %v209, 0.0
    %215 = vadd.xlane.f32.xlu0 %v214
    %v216 = vpop.xlane.xlu0 %215
    %v217 = vrcp.pop %v213
    %v218 = vrcp.pop %v216
    %v219 = vmul.f32 %v207, %v217
    %v220 = vmul.f32 %v209, %v218
    %v222 = vsel %vm210, %v197, 0
    %v225 = vsel %vm210, %v219, 0
    %v228 = vsel %vm210, %v220, 0
    %230 = vmatprep.subr.mxu0 0.0
    %231 = vmatpush1.xpose.msra.mxu0 0.0
    %232 = vmatprep.subr.mxu0 0.0
    %233 = vmatpush1.xpose.msra.mxu0 0.0
    %234 = vmatprep.subr.mxu0 0.0
    %235 = vmatpush1.xpose.msra.mxu0 0.0
    %236 = vmatprep.subr.mxu0 0.0
    %237 = vmatpush1.xpose.msra.mxu0 0.0
    %238 = vmatprep.subr.mxu0 0.0
    %239 = vmatpush1.xpose.msra.mxu0 0.0
    %240 = vmatprep.subr.mxu0 0.0
    %241 = vmatpush1.xpose.msra.mxu0 0.0
    %242 = vmatprep.subr.mxu0 0.0
    %243 = vmatpush1.xpose.msra.mxu0 0.0
    %244 = vmatprep.subr.mxu0 0.0
    %245 = vmatpush1.xpose.msra.mxu0 0.0
    %246 = vmatprep.subr.mxu0 0.0
    %247 = vmatpush1.xpose.msra.mxu0 0.0
    %248 = vmatprep.subr.mxu0 0.0
    %249 = vmatpush1.xpose.msra.mxu0 0.0
    %250 = vmatprep.subr.mxu0 0.0
    %251 = vmatpush1.xpose.msra.mxu0 0.0
    %252 = vmatprep.subr.mxu0 0.0
    %253 = vmatpush1.xpose.msra.mxu0 0.0
    %254 = vmatprep.subr.mxu0 0.0
    %255 = vmatpush1.xpose.msra.mxu0 0.0
    %256 = vmatprep.subr.mxu0 0.0
    %257 = vmatpush1.xpose.msra.mxu0 0.0
    %258 = vmatprep.subr.mxu0 0.0
    %259 = vmatpush1.xpose.msra.mxu0 %v228
    %260 = vmatprep.subr.mxu0 0.0
    %261 = vmatpush1.xpose.msra.mxu0 %v225
    %262 = vmatprep.subr.mxu0 0.0
    %263 = vmatpush2.xpose.msra.mxu0 0.0
    %264 = vmatprep.subr.mxu0 0.0
    %265 = vmatpush2.xpose.msra.mxu0 0.0
    %266 = vmatprep.subr.mxu0 0.0
    %267 = vmatpush2.xpose.msra.mxu0 0.0
    %268 = vmatprep.subr.mxu0 0.0
    %269 = vmatpush2.xpose.msra.mxu0 0.0
    %270 = vmatprep.subr.mxu0 0.0
    %271 = vmatpush2.xpose.msra.mxu0 0.0
    %272 = vmatprep.subr.mxu0 0.0
    %273 = vmatpush2.xpose.msra.mxu0 0.0
    %274 = vmatprep.subr.mxu0 0.0
    %275 = vmatpush2.xpose.msra.mxu0 0.0
    %276 = vmatprep.subr.mxu0 0.0
    %277 = vmatpush2.xpose.msra.mxu0 0.0
    %278 = vmatprep.subr.mxu0 0.0
    %279 = vmatpush2.xpose.msra.mxu0 0.0
    %280 = vmatprep.subr.mxu0 0.0
    %281 = vmatpush2.xpose.msra.mxu0 0.0
    %282 = vmatprep.subr.mxu0 0.0
    %283 = vmatpush2.xpose.msra.mxu0 0.0
    %284 = vmatprep.subr.mxu0 0.0
    %285 = vmatpush2.xpose.msra.mxu0 0.0
    %286 = vmatprep.subr.mxu0 0.0
    %287 = vmatpush2.xpose.msra.mxu0 0.0
    %288 = vmatprep.subr.mxu0 0.0
    %289 = vmatpush2.xpose.msra.mxu0 0.0
    %290 = vmatprep.subr.mxu0 0.0
    %291 = vmatpush2.xpose.msra.mxu0 0.0
    %292 = vmatprep.subr.mxu0 0.0
    %293 = vmatpush2.xpose.msra.mxu0 0.0
    %294 = vmatprep.mubr.f32.mxu0 0.0
    %295 = vmatmul.mubr.f32.gmra.mxu0 %v222
    %v296 = vpop.f32.mrf.mxu0
    %v297 = vadd.f32 0.0, %v296
    %v298 = vpop.f32.mrf.mxu0
    %299 = vdwg.mxu0
    %302 = vrot.lane.b32.xlu0 %v207, 64
    %v303 = vpop.permute.xlu0 %302
    %304 = vrot.lane.b32.xlu0 %v209, 64
    %v305 = vpop.permute.xlu0 %304
    %v308 = vsel %vm210, %v303, 0.0
    %309 = vadd.xlane.f32.xlu0 %v308
    %v310 = vpop.xlane.xlu0 %309
    %v311 = vsel %vm210, %v305, 0.0
    %312 = vadd.xlane.f32.xlu0 %v311
    %v313 = vpop.xlane.xlu0 %312
    %v314 = vrcp.pop %v310
    %v315 = vrcp.pop %v313
    %v316 = vmul.f32 %v207, %v314
    %v317 = vmul.f32 %v209, %v315
    %318 = vrot.lane.b32.xlu0 %v197, 64
    %v319 = vpop.permute.xlu0 %318
    %322 = vrot.lane.b32.xlu0 %v316, 64
    %v323 = vpop.permute.xlu0 %322
    %324 = vrot.lane.b32.xlu0 %v317, 64
    %v325 = vpop.permute.xlu0 %324
    %v326 = vsel %vm210, %v319, 0
    %v328 = vsel %vm210, %v323, 0
    %v330 = vsel %vm210, %v325, 0
    %332 = vmatprep.subr.mxu0 0.0
    %333 = vmatpush1.xpose.msra.mxu0 0.0
    %334 = vmatprep.subr.mxu0 0.0
    %335 = vmatpush1.xpose.msra.mxu0 0.0
    %336 = vmatprep.subr.mxu0 0.0
    %337 = vmatpush1.xpose.msra.mxu0 0.0
    %338 = vmatprep.subr.mxu0 0.0
    %339 = vmatpush1.xpose.msra.mxu0 0.0
    %340 = vmatprep.subr.mxu0 0.0
    %341 = vmatpush1.xpose.msra.mxu0 0.0
    %342 = vmatprep.subr.mxu0 0.0
    %343 = vmatpush1.xpose.msra.mxu0 0.0
    %344 = vmatprep.subr.mxu0 0.0
    %345 = vmatpush1.xpose.msra.mxu0 0.0
    %346 = vmatprep.subr.mxu0 0.0
    %347 = vmatpush1.xpose.msra.mxu0 0.0
    %348 = vmatprep.subr.mxu0 0.0
    %349 = vmatpush1.xpose.msra.mxu0 0.0
    %350 = vmatprep.subr.mxu0 0.0
    %351 = vmatpush1.xpose.msra.mxu0 0.0
    %352 = vmatprep.subr.mxu0 0.0
    %353 = vmatpush1.xpose.msra.mxu0 0.0
    %354 = vmatprep.subr.mxu0 0.0
    %355 = vmatpush1.xpose.msra.mxu0 0.0
    %356 = vmatprep.subr.mxu0 0.0
    %357 = vmatpush1.xpose.msra.mxu0 0.0
    %358 = vmatprep.subr.mxu0 0.0
    %359 = vmatpush1.xpose.msra.mxu0 0.0
    %360 = vmatprep.subr.mxu0 0.0
    %361 = vmatpush1.xpose.msra.mxu0 %v330
    %362 = vmatprep.subr.mxu0 0.0
    %363 = vmatpush1.xpose.msra.mxu0 %v328
    %364 = vmatprep.subr.mxu0 0.0
    %365 = vmatpush2.xpose.msra.mxu0 0.0
    %366 = vmatprep.subr.mxu0 0.0
    %367 = vmatpush2.xpose.msra.mxu0 0.0
    %368 = vmatprep.subr.mxu0 0.0
    %369 = vmatpush2.xpose.msra.mxu0 0.0
    %370 = vmatprep.subr.mxu0 0.0
    %371 = vmatpush2.xpose.msra.mxu0 0.0
    %372 = vmatprep.subr.mxu0 0.0
    %373 = vmatpush2.xpose.msra.mxu0 0.0
    %374 = vmatprep.subr.mxu0 0.0
    %375 = vmatpush2.xpose.msra.mxu0 0.0
    %376 = vmatprep.subr.mxu0 0.0
    %377 = vmatpush2.xpose.msra.mxu0 0.0
    %378 = vmatprep.subr.mxu0 0.0
    %379 = vmatpush2.xpose.msra.mxu0 0.0
    %380 = vmatprep.subr.mxu0 0.0
    %381 = vmatpush2.xpose.msra.mxu0 0.0
    %382 = vmatprep.subr.mxu0 0.0
    %383 = vmatpush2.xpose.msra.mxu0 0.0
    %384 = vmatprep.subr.mxu0 0.0
    %385 = vmatpush2.xpose.msra.mxu0 0.0
    %386 = vmatprep.subr.mxu0 0.0
    %387 = vmatpush2.xpose.msra.mxu0 0.0
    %388 = vmatprep.subr.mxu0 0.0
    %389 = vmatpush2.xpose.msra.mxu0 0.0
    %390 = vmatprep.subr.mxu0 0.0
    %391 = vmatpush2.xpose.msra.mxu0 0.0
    %392 = vmatprep.subr.mxu0 0.0
    %393 = vmatpush2.xpose.msra.mxu0 0.0
    %394 = vmatprep.subr.mxu0 0.0
    %395 = vmatpush2.xpose.msra.mxu0 0.0
    %396 = vmatprep.mubr.f32.mxu0 0.0
    %397 = vmatmul.mubr.f32.gmra.mxu0 %v326
    %v398 = vpop.f32.mrf.mxu0
    %v399 = vadd.f32 0.0, %v398
    %v400 = vpop.f32.mrf.mxu0
    %401 = vdwg.mxu0
    %v402 = vrot.slane %v197, 4
    %403 = vrot.lane.b32.xlu0 %v402, 64
    %v404 = vpop.permute.xlu0 %403
    %vm406 = vcmask 1043456
    %v407 = vsel %vm406, %v197, %v404
    %v408 = vsel %vm210, %v407, 1.0
    %v409 = vld [vmem:[#allocation2] sm:$0xff]
    %v410 = vld [vmem:[#allocation2 + $0x8] sm:$0xff]
    %v411 = vld [vmem:[#allocation2 + $0x10] sm:$0xff]
    %v412 = vld [vmem:[#allocation2 + $0x18] sm:$0xff]
    %v413 = vld [vmem:[#allocation2 + $0x20] sm:$0xff]
    %v414 = vld [vmem:[#allocation2 + $0x28] sm:$0xff]
    %v415 = vld [vmem:[#allocation2 + $0x30] sm:$0xff]
    %v416 = vld [vmem:[#allocation2 + $0x38] sm:$0xff]
    %v417 = vld [vmem:[#allocation2 + $0x40] sm:$0xff]
    %v418 = vld [vmem:[#allocation2 + $0x48] sm:$0xff]
    %v419 = vld [vmem:[#allocation2 + $0x50] sm:$0xff]
    %v420 = vld [vmem:[#allocation2 + $0x58] sm:$0xff]
    %v421 = vld [vmem:[#allocation2 + $0x60] sm:$0xff]
    %v422 = vld [vmem:[#allocation2 + $0x68] sm:$0xff]
    %v423 = vld [vmem:[#allocation2 + $0x70] sm:$0xff]
    %v424 = vld [vmem:[#allocation2 + $0x78] sm:$0xff]
    %v425 = vld [vmem:[#allocation2 + $0x80] sm:$0xff]
    %v426 = vld [vmem:[#allocation2 + $0x88] sm:$0xff]
    %v427 = vld [vmem:[#allocation2 + $0x90] sm:$0xff]
    %v428 = vld [vmem:[#allocation2 + $0x98] sm:$0xff]
    %v429 = vld [vmem:[#allocation2 + $0xa0] sm:$0xff]
    %v430 = vld [vmem:[#allocation2 + $0xa8] sm:$0xff]
    %v431 = vld [vmem:[#allocation2 + $0xb0] sm:$0xff]
    %v432 = vld [vmem:[#allocation2 + $0xb8] sm:$0xff]
    %v433 = vld [vmem:[#allocation2 + $0xc0] sm:$0xff]
    %v434 = vld [vmem:[#allocation2 + $0xc8] sm:$0xff]
    %v435 = vld [vmem:[#allocation2 + $0xd0] sm:$0xff]
    %v436 = vld [vmem:[#allocation2 + $0xd8] sm:$0xff]
    %v437 = vld [vmem:[#allocation2 + $0xe0] sm:$0xff]
    %v438 = vld [vmem:[#allocation2 + $0xe8] sm:$0xff]
    %v439 = vld [vmem:[#allocation2 + $0xf0] sm:$0xff]
    %v440 = vld [vmem:[#allocation2 + $0xf8] sm:$0xff]
    %v441 = vld [vmem:[#allocation2 + $0x100] sm:$0xff]
    %v442 = vld [vmem:[#allocation2 + $0x108] sm:$0xff]
    %v443 = vld [vmem:[#allocation2 + $0x110] sm:$0xff]
    %v444 = vld [vmem:[#allocation2 + $0x118] sm:$0xff]
    %v445 = vld [vmem:[#allocation2 + $0x120] sm:$0xff]
    %v446 = vld [vmem:[#allocation2 + $0x128] sm:$0xff]
    %v447 = vld [vmem:[#allocation2 + $0x130] sm:$0xff]
    %v448 = vld [vmem:[#allocation2 + $0x138] sm:$0xff]
    %v449 = vld [vmem:[#allocation2 + $0x140] sm:$0xff]
    %v450 = vld [vmem:[#allocation2 + $0x148] sm:$0xff]
    %v451 = vld [vmem:[#allocation2 + $0x150] sm:$0xff]
    %v452 = vld [vmem:[#allocation2 + $0x158] sm:$0xff]
    %v453 = vld [vmem:[#allocation2 + $0x160] sm:$0xff]
    %v454 = vld [vmem:[#allocation2 + $0x168] sm:$0xff]
    %v455 = vld [vmem:[#allocation2 + $0x170] sm:$0xff]
    %v456 = vld [vmem:[#allocation2 + $0x178] sm:$0xff]
    %v457 = vld [vmem:[#allocation2 + $0x180] sm:$0xff]
    %v458 = vld [vmem:[#allocation2 + $0x188] sm:$0xff]
    %v459 = vld [vmem:[#allocation2 + $0x190] sm:$0xff]
    %v460 = vld [vmem:[#allocation2 + $0x198] sm:$0xff]
    %v461 = vld [vmem:[#allocation2 + $0x1a0] sm:$0xff]
    %v462 = vld [vmem:[#allocation2 + $0x1a8] sm:$0xff]
    %v463 = vld [vmem:[#allocation2 + $0x1b0] sm:$0xff]
    %v464 = vld [vmem:[#allocation2 + $0x1b8] sm:$0xff]
    %v465 = vld [vmem:[#allocation2 + $0x1c0] sm:$0xff]
    %v466 = vld [vmem:[#allocation2 + $0x1c8] sm:$0xff]
    %v467 = vld [vmem:[#allocation2 + $0x1d0] sm:$0xff]
    %v468 = vld [vmem:[#allocation2 + $0x1d8] sm:$0xff]
    %v469 = vld [vmem:[#allocation2 + $0x1e0] sm:$0xff]
    %v470 = vld [vmem:[#allocation2 + $0x1e8] sm:$0xff]
    %v471 = vld [vmem:[#allocation2 + $0x1f0] sm:$0xff]
    %v472 = vld [vmem:[#allocation2 + $0x1f8] sm:$0xff]
    %v473 = vld [vmem:[#allocation2 + $0x200] sm:$0x1]
    %v474 = vld [vmem:[#allocation2 + $0x208] sm:$0x1]
    %v475 = vld [vmem:[#allocation2 + $0x210] sm:$0x1]
    %v476 = vld [vmem:[#allocation2 + $0x218] sm:$0x1]
    %v477 = vld [vmem:[#allocation2 + $0x220] sm:$0x1]
    %v478 = vld [vmem:[#allocation2 + $0x228] sm:$0x1]
    %v479 = vld [vmem:[#allocation2 + $0x230] sm:$0x1]
    %v480 = vld [vmem:[#allocation2 + $0x238] sm:$0x1]
    %vm481 = vcmask 531456
    %v483 = vsel %vm481, %v408, 0
    %v486 = vsel %vm76, %v473, 0
    %v489 = vsel %vm76, %v474, 0
    %v492 = vsel %vm76, %v475, 0
    %v495 = vsel %vm76, %v476, 0
    %v498 = vsel %vm76, %v477, 0
    %v501 = vsel %vm76, %v478, 0
    %v504 = vsel %vm76, %v479, 0
    %v507 = vsel %vm76, %v480, 0
    %509 = vmatprep.subr.mxu0 0.0
    %510 = vmatpush1.msra.mxu0 0.0
    %511 = vmatprep.subr.mxu0 0.0
    %512 = vmatpush1.msra.mxu0 0.0
    %513 = vmatprep.subr.mxu0 0.0
    %514 = vmatpush1.msra.mxu0 0.0
    %515 = vmatprep.subr.mxu0 0.0
    %516 = vmatpush1.msra.mxu0 0.0
    %517 = vmatprep.subr.mxu0 0.0
    %518 = vmatpush1.msra.mxu0 0.0
    %519 = vmatprep.subr.mxu0 0.0
    %520 = vmatpush1.msra.mxu0 0.0
    %521 = vmatprep.subr.mxu0 0.0
    %522 = vmatpush1.msra.mxu0 0.0
    %523 = vmatprep.subr.mxu0 %v489
    %524 = vmatpush1.msra.mxu0 %v486
    %525 = vmatprep.subr.mxu0 %v466
    %526 = vmatpush1.msra.mxu0 %v465
    %527 = vmatprep.subr.mxu0 %v458
    %528 = vmatpush1.msra.mxu0 %v457
    %529 = vmatprep.subr.mxu0 %v450
    %530 = vmatpush1.msra.mxu0 %v449
    %531 = vmatprep.subr.mxu0 %v442
    %532 = vmatpush1.msra.mxu0 %v441
    %533 = vmatprep.subr.mxu0 %v434
    %534 = vmatpush1.msra.mxu0 %v433
    %535 = vmatprep.subr.mxu0 %v426
    %536 = vmatpush1.msra.mxu0 %v425
    %537 = vmatprep.subr.mxu0 %v418
    %538 = vmatpush1.msra.mxu0 %v417
    %539 = vmatprep.subr.mxu0 %v410
    %540 = vmatpush1.msra.mxu0 %v409
    %541 = vmatprep.subr.mxu0 0.0
    %542 = vmatpush2.msra.mxu0 0.0
    %543 = vmatprep.subr.mxu0 0.0
    %544 = vmatpush2.msra.mxu0 0.0
    %545 = vmatprep.subr.mxu0 0.0
    %546 = vmatpush2.msra.mxu0 0.0
    %547 = vmatprep.subr.mxu0 0.0
    %548 = vmatpush2.msra.mxu0 0.0
    %549 = vmatprep.subr.mxu0 0.0
    %550 = vmatpush2.msra.mxu0 0.0
    %551 = vmatprep.subr.mxu0 0.0
    %552 = vmatpush2.msra.mxu0 0.0
    %553 = vmatprep.subr.mxu0 0.0
    %554 = vmatpush2.msra.mxu0 0.0
    %555 = vmatprep.subr.mxu0 0.0
    %556 = vmatpush2.msra.mxu0 0.0
    %557 = vmatprep.subr.mxu0 0.0
    %558 = vmatpush2.msra.mxu0 0.0
    %559 = vmatprep.subr.mxu0 0.0
    %560 = vmatpush2.msra.mxu0 0.0
    %561 = vmatprep.subr.mxu0 0.0
    %562 = vmatpush2.msra.mxu0 0.0
    %563 = vmatprep.subr.mxu0 0.0
    %564 = vmatpush2.msra.mxu0 0.0
    %565 = vmatprep.subr.mxu0 0.0
    %566 = vmatpush2.msra.mxu0 0.0
    %567 = vmatprep.subr.mxu0 0.0
    %568 = vmatpush2.msra.mxu0 0.0
    %569 = vmatprep.subr.mxu0 0.0
    %570 = vmatpush2.msra.mxu0 0.0
    %571 = vmatprep.subr.mxu0 0.0
    %572 = vmatpush2.msra.mxu0 0.0
    %573 = vmatprep.mubr.f32.mxu0 0.0
    %574 = vmatmul.mubr.f32.gmra.mxu0 %v483
    %v575 = vpop.f32.mrf.mxu0
    %v576 = vadd.f32 0.0, %v575
    %v577 = vpop.f32.mrf.mxu0
    %v578 = vadd.f32 0.0, %v577
    %579 = vdwg.mxu0
    %580 = vmatprep.subr.mxu0 0.0
    %581 = vmatpush1.msra.mxu0 0.0
    %582 = vmatprep.subr.mxu0 0.0
    %583 = vmatpush1.msra.mxu0 0.0
    %584 = vmatprep.subr.mxu0 0.0
    %585 = vmatpush1.msra.mxu0 0.0
    %586 = vmatprep.subr.mxu0 0.0
    %587 = vmatpush1.msra.mxu0 0.0
    %588 = vmatprep.subr.mxu0 0.0
    %589 = vmatpush1.msra.mxu0 0.0
    %590 = vmatprep.subr.mxu0 0.0
    %591 = vmatpush1.msra.mxu0 0.0
    %592 = vmatprep.subr.mxu0 0.0
    %593 = vmatpush1.msra.mxu0 0.0
    %594 = vmatprep.subr.mxu0 %v495
    %595 = vmatpush1.msra.mxu0 %v492
    %596 = vmatprep.subr.mxu0 %v468
    %597 = vmatpush1.msra.mxu0 %v467
    %598 = vmatprep.subr.mxu0 %v460
    %599 = vmatpush1.msra.mxu0 %v459
    %600 = vmatprep.subr.mxu0 %v452
    %601 = vmatpush1.msra.mxu0 %v451
    %602 = vmatprep.subr.mxu0 %v444
    %603 = vmatpush1.msra.mxu0 %v443
    %604 = vmatprep.subr.mxu0 %v436
    %605 = vmatpush1.msra.mxu0 %v435
    %606 = vmatprep.subr.mxu0 %v428
    %607 = vmatpush1.msra.mxu0 %v427
    %608 = vmatprep.subr.mxu0 %v420
    %609 = vmatpush1.msra.mxu0 %v419
    %610 = vmatprep.subr.mxu0 %v412
    %611 = vmatpush1.msra.mxu0 %v411
    %612 = vmatprep.subr.mxu0 0.0
    %613 = vmatpush2.msra.mxu0 0.0
    %614 = vmatprep.subr.mxu0 0.0
    %615 = vmatpush2.msra.mxu0 0.0
    %616 = vmatprep.subr.mxu0 0.0
    %617 = vmatpush2.msra.mxu0 0.0
    %618 = vmatprep.subr.mxu0 0.0
    %619 = vmatpush2.msra.mxu0 0.0
    %620 = vmatprep.subr.mxu0 0.0
    %621 = vmatpush2.msra.mxu0 0.0
    %622 = vmatprep.subr.mxu0 0.0
    %623 = vmatpush2.msra.mxu0 0.0
    %624 = vmatprep.subr.mxu0 0.0
    %625 = vmatpush2.msra.mxu0 0.0
    %626 = vmatprep.subr.mxu0 0.0
    %627 = vmatpush2.msra.mxu0 0.0
    %628 = vmatprep.subr.mxu0 0.0
    %629 = vmatpush2.msra.mxu0 0.0
    %630 = vmatprep.subr.mxu0 0.0
    %631 = vmatpush2.msra.mxu0 0.0
    %632 = vmatprep.subr.mxu0 0.0
    %633 = vmatpush2.msra.mxu0 0.0
    %634 = vmatprep.subr.mxu0 0.0
    %635 = vmatpush2.msra.mxu0 0.0
    %636 = vmatprep.subr.mxu0 0.0
    %637 = vmatpush2.msra.mxu0 0.0
    %638 = vmatprep.subr.mxu0 0.0
    %639 = vmatpush2.msra.mxu0 0.0
    %640 = vmatprep.subr.mxu0 0.0
    %641 = vmatpush2.msra.mxu0 0.0
    %642 = vmatprep.subr.mxu0 0.0
    %643 = vmatpush2.msra.mxu0 0.0
    %644 = vmatprep.mubr.f32.mxu0 0.0
    %645 = vmatmul.mubr.f32.gmra.mxu0 %v483
    %v646 = vpop.f32.mrf.mxu0
    %v647 = vadd.f32 0.0, %v646
    %v648 = vpop.f32.mrf.mxu0
    %v649 = vadd.f32 0.0, %v648
    %650 = vdwg.mxu0
    %651 = vmatprep.subr.mxu0 0.0
    %652 = vmatpush1.msra.mxu0 0.0
    %653 = vmatprep.subr.mxu0 0.0
    %654 = vmatpush1.msra.mxu0 0.0
    %655 = vmatprep.subr.mxu0 0.0
    %656 = vmatpush1.msra.mxu0 0.0
    %657 = vmatprep.subr.mxu0 0.0
    %658 = vmatpush1.msra.mxu0 0.0
    %659 = vmatprep.subr.mxu0 0.0
    %660 = vmatpush1.msra.mxu0 0.0
    %661 = vmatprep.subr.mxu0 0.0
    %662 = vmatpush1.msra.mxu0 0.0
    %663 = vmatprep.subr.mxu0 0.0
    %664 = vmatpush1.msra.mxu0 0.0
    %665 = vmatprep.subr.mxu0 %v501
    %666 = vmatpush1.msra.mxu0 %v498
    %667 = vmatprep.subr.mxu0 %v470
    %668 = vmatpush1.msra.mxu0 %v469
    %669 = vmatprep.subr.mxu0 %v462
    %670 = vmatpush1.msra.mxu0 %v461
    %671 = vmatprep.subr.mxu0 %v454
    %672 = vmatpush1.msra.mxu0 %v453
    %673 = vmatprep.subr.mxu0 %v446
    %674 = vmatpush1.msra.mxu0 %v445
    %675 = vmatprep.subr.mxu0 %v438
    %676 = vmatpush1.msra.mxu0 %v437
    %677 = vmatprep.subr.mxu0 %v430
    %678 = vmatpush1.msra.mxu0 %v429
    %679 = vmatprep.subr.mxu0 %v422
    %680 = vmatpush1.msra.mxu0 %v421
    %681 = vmatprep.subr.mxu0 %v414
    %682 = vmatpush1.msra.mxu0 %v413
    %683 = vmatprep.subr.mxu0 0.0
    %684 = vmatpush2.msra.mxu0 0.0
    %685 = vmatprep.subr.mxu0 0.0
    %686 = vmatpush2.msra.mxu0 0.0
    %687 = vmatprep.subr.mxu0 0.0
    %688 = vmatpush2.msra.mxu0 0.0
    %689 = vmatprep.subr.mxu0 0.0
    %690 = vmatpush2.msra.mxu0 0.0
    %691 = vmatprep.subr.mxu0 0.0
    %692 = vmatpush2.msra.mxu0 0.0
    %693 = vmatprep.subr.mxu0 0.0
    %694 = vmatpush2.msra.mxu0 0.0
    %695 = vmatprep.subr.mxu0 0.0
    %696 = vmatpush2.msra.mxu0 0.0
    %697 = vmatprep.subr.mxu0 0.0
    %698 = vmatpush2.msra.mxu0 0.0
    %699 = vmatprep.subr.mxu0 0.0
    %700 = vmatpush2.msra.mxu0 0.0
    %701 = vmatprep.subr.mxu0 0.0
    %702 = vmatpush2.msra.mxu0 0.0
    %703 = vmatprep.subr.mxu0 0.0
    %704 = vmatpush2.msra.mxu0 0.0
    %705 = vmatprep.subr.mxu0 0.0
    %706 = vmatpush2.msra.mxu0 0.0
    %707 = vmatprep.subr.mxu0 0.0
    %708 = vmatpush2.msra.mxu0 0.0
    %709 = vmatprep.subr.mxu0 0.0
    %710 = vmatpush2.msra.mxu0 0.0
    %711 = vmatprep.subr.mxu0 0.0
    %712 = vmatpush2.msra.mxu0 0.0
    %713 = vmatprep.subr.mxu0 0.0
    %714 = vmatpush2.msra.mxu0 0.0
    %715 = vmatprep.mubr.f32.mxu0 0.0
    %716 = vmatmul.mubr.f32.gmra.mxu0 %v483
    %v717 = vpop.f32.mrf.mxu0
    %v718 = vadd.f32 0.0, %v717
    %v719 = vpop.f32.mrf.mxu0
    %v720 = vadd.f32 0.0, %v719
    %721 = vdwg.mxu0
    %722 = vmatprep.subr.mxu0 0.0
    %723 = vmatpush1.msra.mxu0 0.0
    %724 = vmatprep.subr.mxu0 0.0
    %725 = vmatpush1.msra.mxu0 0.0
    %726 = vmatprep.subr.mxu0 0.0
    %727 = vmatpush1.msra.mxu0 0.0
    %728 = vmatprep.subr.mxu0 0.0
    %729 = vmatpush1.msra.mxu0 0.0
    %730 = vmatprep.subr.mxu0 0.0
    %731 = vmatpush1.msra.mxu0 0.0
    %732 = vmatprep.subr.mxu0 0.0
    %733 = vmatpush1.msra.mxu0 0.0
    %734 = vmatprep.subr.mxu0 0.0
    %735 = vmatpush1.msra.mxu0 0.0
    %736 = vmatprep.subr.mxu0 %v507
    %737 = vmatpush1.msra.mxu0 %v504
    %738 = vmatprep.subr.mxu0 %v472
    %739 = vmatpush1.msra.mxu0 %v471
    %740 = vmatprep.subr.mxu0 %v464
    %741 = vmatpush1.msra.mxu0 %v463
    %742 = vmatprep.subr.mxu0 %v456
    %743 = vmatpush1.msra.mxu0 %v455
    %744 = vmatprep.subr.mxu0 %v448
    %745 = vmatpush1.msra.mxu0 %v447
    %746 = vmatprep.subr.mxu0 %v440
    %747 = vmatpush1.msra.mxu0 %v439
    %748 = vmatprep.subr.mxu0 %v432
    %749 = vmatpush1.msra.mxu0 %v431
    %750 = vmatprep.subr.mxu0 %v424
    %751 = vmatpush1.msra.mxu0 %v423
    %752 = vmatprep.subr.mxu0 %v416
    %753 = vmatpush1.msra.mxu0 %v415
    %754 = vmatprep.subr.mxu0 0.0
    %755 = vmatpush2.msra.mxu0 0.0
    %756 = vmatprep.subr.mxu0 0.0
    %757 = vmatpush2.msra.mxu0 0.0
    %758 = vmatprep.subr.mxu0 0.0
    %759 = vmatpush2.msra.mxu0 0.0
    %760 = vmatprep.subr.mxu0 0.0
    %761 = vmatpush2.msra.mxu0 0.0
    %762 = vmatprep.subr.mxu0 0.0
    %763 = vmatpush2.msra.mxu0 0.0
    %764 = vmatprep.subr.mxu0 0.0
    %765 = vmatpush2.msra.mxu0 0.0
    %766 = vmatprep.subr.mxu0 0.0
    %767 = vmatpush2.msra.mxu0 0.0
    %768 = vmatprep.subr.mxu0 0.0
    %769 = vmatpush2.msra.mxu0 0.0
    %770 = vmatprep.subr.mxu0 0.0
    %771 = vmatpush2.msra.mxu0 0.0
    %772 = vmatprep.subr.mxu0 0.0
    %773 = vmatpush2.msra.mxu0 0.0
    %774 = vmatprep.subr.mxu0 0.0
    %775 = vmatpush2.msra.mxu0 0.0
    %776 = vmatprep.subr.mxu0 0.0
    %777 = vmatpush2.msra.mxu0 0.0
    %778 = vmatprep.subr.mxu0 0.0
    %779 = vmatpush2.msra.mxu0 0.0
    %780 = vmatprep.subr.mxu0 0.0
    %781 = vmatpush2.msra.mxu0 0.0
    %782 = vmatprep.subr.mxu0 0.0
    %783 = vmatpush2.msra.mxu0 0.0
    %784 = vmatprep.subr.mxu0 0.0
    %785 = vmatpush2.msra.mxu0 0.0
    %786 = vmatprep.mubr.f32.mxu0 0.0
    %787 = vmatmul.mubr.f32.gmra.mxu0 %v483
    %v788 = vpop.f32.mrf.mxu0
    %v789 = vadd.f32 0.0, %v788
    %v790 = vpop.f32.mrf.mxu0
    %v791 = vadd.f32 0.0, %v790
    %792 = vdwg.mxu0
    %794 = vrot.lane.b32.xlu0 %v576, 64
    %v795 = vpop.permute.xlu0 %794
    %798 = vrot.lane.b32.xlu0 %v578, 64
    %v799 = vpop.permute.xlu0 %798
    %802 = vrot.lane.b32.xlu0 %v647, 64
    %v803 = vpop.permute.xlu0 %802
    %806 = vrot.lane.b32.xlu0 %v649, 64
    %v807 = vpop.permute.xlu0 %806
    %810 = vrot.lane.b32.xlu0 %v718, 64
    %v811 = vpop.permute.xlu0 %810
    %814 = vrot.lane.b32.xlu0 %v720, 64
    %v815 = vpop.permute.xlu0 %814
    %818 = vrot.lane.b32.xlu0 %v789, 64
    %v819 = vpop.permute.xlu0 %818
    %822 = vrot.lane.b32.xlu0 %v791, 64
    %v823 = vpop.permute.xlu0 %822
    %v825 = vcombine.low %v576, %v578
    %v826 = vcombine.high %v576, %v578
    %v828 = vunpack.c.l.s4 1983009808
    %v829 = vunpack.c.0.s8 %v828
    %v830 = vlaneseq
    %v831 = vshrl.u32 %v830, 7
    %v832 = vsub.s32 %v829, %v831
    %v833 = vrot.slane %v825, %v832
    %v835 = vunpack.c.l.s4 1983009808
    %v836 = vunpack.c.0.s8 %v835
    %v837 = vlaneseq
    %v838 = vshrl.u32 %v837, 7
    %v839 = vsub.s32 %v836, %v838
    %v840 = vrot.slane %v826, %v839
    %v841 = vcombine.low %v795, %v799
    %v842 = vcombine.high %v795, %v799
    %v844 = vunpack.c.l.s4 1983009808
    %v845 = vunpack.c.0.s8 %v844
    %v846 = vlaneseq
    %v847 = vshrl.u32 %v846, 7
    %v848 = vsub.s32 %v845, %v847
    %v849 = vrot.slane %v841, %v848
    %v851 = vunpack.c.l.s4 1983009808
    %v852 = vunpack.c.0.s8 %v851
    %v853 = vlaneseq
    %v854 = vshrl.u32 %v853, 7
    %v855 = vsub.s32 %v852, %v854
    %v856 = vrot.slane %v842, %v855
    %v857 = vcombine.low %v647, %v649
    %v858 = vcombine.high %v647, %v649
    %v860 = vunpack.c.l.s4 1983009808
    %v861 = vunpack.c.0.s8 %v860
    %v862 = vlaneseq
    %v863 = vshrl.u32 %v862, 7
    %v864 = vsub.s32 %v861, %v863
    %v865 = vrot.slane %v857, %v864
    %v867 = vunpack.c.l.s4 1983009808
    %v868 = vunpack.c.0.s8 %v867
    %v869 = vlaneseq
    %v870 = vshrl.u32 %v869, 7
    %v871 = vsub.s32 %v868, %v870
    %v872 = vrot.slane %v858, %v871
    %v873 = vcombine.low %v803, %v807
    %v874 = vcombine.high %v803, %v807
    %v876 = vunpack.c.l.s4 1983009808
    %v877 = vunpack.c.0.s8 %v876
    %v878 = vlaneseq
    %v879 = vshrl.u32 %v878, 7
    %v880 = vsub.s32 %v877, %v879
    %v881 = vrot.slane %v873, %v880
    %v883 = vunpack.c.l.s4 1983009808
    %v884 = vunpack.c.0.s8 %v883
    %v885 = vlaneseq
    %v886 = vshrl.u32 %v885, 7
    %v887 = vsub.s32 %v884, %v886
    %v888 = vrot.slane %v874, %v887
    %v889 = vcombine.low %v833, %v849
    %v890 = vcombine.high %v833, %v849
    %v892 = vunpack.c.l.s4 1934713408
    %v893 = vunpack.c.0.s8 %v892
    %v894 = vlaneseq
    %v895 = vshrl.u32 %v894, 7
    %v896 = vsub.s32 %v893, %v895
    %v897 = vrot.slane %v889, %v896
    %v899 = vunpack.c.l.s4 1934713408
    %v900 = vunpack.c.0.s8 %v899
    %v901 = vlaneseq
    %v902 = vshrl.u32 %v901, 7
    %v903 = vsub.s32 %v900, %v902
    %v904 = vrot.slane %v890, %v903
    %v905 = vcombine.low %v840, %v856
    %v906 = vcombine.high %v840, %v856
    %v908 = vunpack.c.l.s4 1934713408
    %v909 = vunpack.c.0.s8 %v908
    %v910 = vlaneseq
    %v911 = vshrl.u32 %v910, 7
    %v912 = vsub.s32 %v909, %v911
    %v913 = vrot.slane %v905, %v912
    %v915 = vunpack.c.l.s4 1934713408
    %v916 = vunpack.c.0.s8 %v915
    %v917 = vlaneseq
    %v918 = vshrl.u32 %v917, 7
    %v919 = vsub.s32 %v916, %v918
    %v920 = vrot.slane %v906, %v919
    %v921 = vcombine.low %v865, %v881
    %v922 = vcombine.high %v865, %v881
    %v924 = vunpack.c.l.s4 1934713408
    %v925 = vunpack.c.0.s8 %v924
    %v926 = vlaneseq
    %v927 = vshrl.u32 %v926, 7
    %v928 = vsub.s32 %v925, %v927
    %v929 = vrot.slane %v921, %v928
    %v931 = vunpack.c.l.s4 1934713408
    %v932 = vunpack.c.0.s8 %v931
    %v933 = vlaneseq
    %v934 = vshrl.u32 %v933, 7
    %v935 = vsub.s32 %v932, %v934
    %v936 = vrot.slane %v922, %v935
    %v937 = vcombine.low %v872, %v888
    %v938 = vcombine.high %v872, %v888
    %v940 = vunpack.c.l.s4 1934713408
    %v941 = vunpack.c.0.s8 %v940
    %v942 = vlaneseq
    %v943 = vshrl.u32 %v942, 7
    %v944 = vsub.s32 %v941, %v943
    %v945 = vrot.slane %v937, %v944
    %v947 = vunpack.c.l.s4 1934713408
    %v948 = vunpack.c.0.s8 %v947
    %v949 = vlaneseq
    %v950 = vshrl.u32 %v949, 7
    %v951 = vsub.s32 %v948, %v950
    %v952 = vrot.slane %v938, %v951
    %v953 = vcombine.low %v897, %v929
    %v954 = vcombine.high %v897, %v929
    %v955 = vcombine.low %v904, %v936
    %v956 = vcombine.high %v904, %v936
    %v957 = vcombine.low %v913, %v945
    %v958 = vcombine.high %v913, %v945
    %v959 = vcombine.low %v920, %v952
    %v960 = vcombine.high %v920, %v952
    %v961 = vcombine.low %v718, %v720
    %v962 = vcombine.high %v718, %v720
    %v964 = vunpack.c.l.s4 1983009808
    %v965 = vunpack.c.0.s8 %v964
    %v966 = vlaneseq
    %v967 = vshrl.u32 %v966, 7
    %v968 = vsub.s32 %v965, %v967
    %v969 = vrot.slane %v961, %v968
    %v971 = vunpack.c.l.s4 1983009808
    %v972 = vunpack.c.0.s8 %v971
    %v973 = vlaneseq
    %v974 = vshrl.u32 %v973, 7
    %v975 = vsub.s32 %v972, %v974
    %v976 = vrot.slane %v962, %v975
    %v977 = vcombine.low %v811, %v815
    %v978 = vcombine.high %v811, %v815
    %v980 = vunpack.c.l.s4 1983009808
    %v981 = vunpack.c.0.s8 %v980
    %v982 = vlaneseq
    %v983 = vshrl.u32 %v982, 7
    %v984 = vsub.s32 %v981, %v983
    %v985 = vrot.slane %v977, %v984
    %v987 = vunpack.c.l.s4 1983009808
    %v988 = vunpack.c.0.s8 %v987
    %v989 = vlaneseq
    %v990 = vshrl.u32 %v989, 7
    %v991 = vsub.s32 %v988, %v990
    %v992 = vrot.slane %v978, %v991
    %v993 = vcombine.low %v789, %v791
    %v994 = vcombine.high %v789, %v791
    %v996 = vunpack.c.l.s4 1983009808
    %v997 = vunpack.c.0.s8 %v996
    %v998 = vlaneseq
    %v999 = vshrl.u32 %v998, 7
    %v1000 = vsub.s32 %v997, %v999
    %v1001 = vrot.slane %v993, %v1000
    %v1003 = vunpack.c.l.s4 1983009808
    %v1004 = vunpack.c.0.s8 %v1003
    %v1005 = vlaneseq
    %v1006 = vshrl.u32 %v1005, 7
    %v1007 = vsub.s32 %v1004, %v1006
    %v1008 = vrot.slane %v994, %v1007
    %v1009 = vcombine.low %v819, %v823
    %v1010 = vcombine.high %v819, %v823
    %v1012 = vunpack.c.l.s4 1983009808
    %v1013 = vunpack.c.0.s8 %v1012
    %v1014 = vlaneseq
    %v1015 = vshrl.u32 %v1014, 7
    %v1016 = vsub.s32 %v1013, %v1015
    %v1017 = vrot.slane %v1009, %v1016
    %v1019 = vunpack.c.l.s4 1983009808
    %v1020 = vunpack.c.0.s8 %v1019
    %v1021 = vlaneseq
    %v1022 = vshrl.u32 %v1021, 7
    %v1023 = vsub.s32 %v1020, %v1022
    %v1024 = vrot.slane %v1010, %v1023
    %v1025 = vcombine.low %v969, %v985
    %v1026 = vcombine.high %v969, %v985
    %v1028 = vunpack.c.l.s4 1934713408
    %v1029 = vunpack.c.0.s8 %v1028
    %v1030 = vlaneseq
    %v1031 = vshrl.u32 %v1030, 7
    %v1032 = vsub.s32 %v1029, %v1031
    %v1033 = vrot.slane %v1025, %v1032
    %v1035 = vunpack.c.l.s4 1934713408
    %v1036 = vunpack.c.0.s8 %v1035
    %v1037 = vlaneseq
    %v1038 = vshrl.u32 %v1037, 7
    %v1039 = vsub.s32 %v1036, %v1038
    %v1040 = vrot.slane %v1026, %v1039
    %v1041 = vcombine.low %v976, %v992
    %v1042 = vcombine.high %v976, %v992
    %v1044 = vunpack.c.l.s4 1934713408
    %v1045 = vunpack.c.0.s8 %v1044
    %v1046 = vlaneseq
    %v1047 = vshrl.u32 %v1046, 7
    %v1048 = vsub.s32 %v1045, %v1047
    %v1049 = vrot.slane %v1041, %v1048
    %v1051 = vunpack.c.l.s4 1934713408
    %v1052 = vunpack.c.0.s8 %v1051
    %v1053 = vlaneseq
    %v1054 = vshrl.u32 %v1053, 7
    %v1055 = vsub.s32 %v1052, %v1054
    %v1056 = vrot.slane %v1042, %v1055
    %v1057 = vcombine.low %v1001, %v1017
    %v1058 = vcombine.high %v1001, %v1017
    %v1060 = vunpack.c.l.s4 1934713408
    %v1061 = vunpack.c.0.s8 %v1060
    %v1062 = vlaneseq
    %v1063 = vshrl.u32 %v1062, 7
    %v1064 = vsub.s32 %v1061, %v1063
    %v1065 = vrot.slane %v1057, %v1064
    %v1067 = vunpack.c.l.s4 1934713408
    %v1068 = vunpack.c.0.s8 %v1067
    %v1069 = vlaneseq
    %v1070 = vshrl.u32 %v1069, 7
    %v1071 = vsub.s32 %v1068, %v1070
    %v1072 = vrot.slane %v1058, %v1071
    %v1073 = vcombine.low %v1008, %v1024
    %v1074 = vcombine.high %v1008, %v1024
    %v1076 = vunpack.c.l.s4 1934713408
    %v1077 = vunpack.c.0.s8 %v1076
    %v1078 = vlaneseq
    %v1079 = vshrl.u32 %v1078, 7
    %v1080 = vsub.s32 %v1077, %v1079
    %v1081 = vrot.slane %v1073, %v1080
    %v1083 = vunpack.c.l.s4 1934713408
    %v1084 = vunpack.c.0.s8 %v1083
    %v1085 = vlaneseq
    %v1086 = vshrl.u32 %v1085, 7
    %v1087 = vsub.s32 %v1084, %v1086
    %v1088 = vrot.slane %v1074, %v1087
    %v1089 = vcombine.low %v1033, %v1065
    %v1090 = vcombine.high %v1033, %v1065
    %v1091 = vcombine.low %v1040, %v1072
    %v1092 = vcombine.high %v1040, %v1072
    %v1093 = vcombine.low %v1049, %v1081
    %v1094 = vcombine.high %v1049, %v1081
    %v1095 = vcombine.low %v1056, %v1088
    %v1096 = vcombine.high %v1056, %v1088
    %v1097 = vlaneseq
    %v1098 = vshrl.u32 %v1097, 7
    %v1099 = vsub.s32 0, %v1098
    %v1100 = vrot.slane %v297, %v1099
    %1102 = vbcast.lane.b32.xlu0 %v1100, 256
    %v1103 = vpop.permute.xlu0 %1102
    %s1105 = sor.u32 256, 8
    %1106 = vbcast.lane.b32.xlu0 %v1100, %s1105
    %v1107 = vpop.permute.xlu0 %1106
    %v1108 = vlaneseq
    %v1109 = vshrl.u32 %v1108, 7
    %v1110 = vsub.s32 1, %v1109
    %v1111 = vrot.slane %v297, %v1110
    %1113 = vbcast.lane.b32.xlu0 %v1111, 256
    %v1114 = vpop.permute.xlu0 %1113
    %s1116 = sor.u32 256, 8
    %1117 = vbcast.lane.b32.xlu0 %v1111, %s1116
    %v1118 = vpop.permute.xlu0 %1117
    %v1119 = vlaneseq
    %v1120 = vshrl.u32 %v1119, 7
    %v1121 = vsub.s32 2, %v1120
    %v1122 = vrot.slane %v297, %v1121
    %1124 = vbcast.lane.b32.xlu0 %v1122, 256
    %v1125 = vpop.permute.xlu0 %1124
    %s1127 = sor.u32 256, 8
    %1128 = vbcast.lane.b32.xlu0 %v1122, %s1127
    %v1129 = vpop.permute.xlu0 %1128
    %v1130 = vlaneseq
    %v1131 = vshrl.u32 %v1130, 7
    %v1132 = vsub.s32 3, %v1131
    %v1133 = vrot.slane %v297, %v1132
    %1135 = vbcast.lane.b32.xlu0 %v1133, 256
    %v1136 = vpop.permute.xlu0 %1135
    %s1138 = sor.u32 256, 8
    %1139 = vbcast.lane.b32.xlu0 %v1133, %s1138
    %v1140 = vpop.permute.xlu0 %1139
    %v1141 = vadd.f32 %v953, %v1103
    %v1142 = vadd.f32 %v1089, %v1107
    %v1143 = vadd.f32 %v954, %v1114
    %v1144 = vadd.f32 %v1090, %v1118
    %v1145 = vadd.f32 %v955, %v1125
    %v1146 = vadd.f32 %v1091, %v1129
    %v1147 = vadd.f32 %v956, %v1136
    %v1148 = vadd.f32 %v1092, %v1140
    %v1149 = vlaneseq
    %v1150 = vshrl.u32 %v1149, 7
    %v1151 = vsub.s32 0, %v1150
    %v1152 = vrot.slane %v399, %v1151
    %1154 = vbcast.lane.b32.xlu0 %v1152, 256
    %v1155 = vpop.permute.xlu0 %1154
    %s1157 = sor.u32 256, 8
    %1158 = vbcast.lane.b32.xlu0 %v1152, %s1157
    %v1159 = vpop.permute.xlu0 %1158
    %v1160 = vlaneseq
    %v1161 = vshrl.u32 %v1160, 7
    %v1162 = vsub.s32 1, %v1161
    %v1163 = vrot.slane %v399, %v1162
    %1165 = vbcast.lane.b32.xlu0 %v1163, 256
    %v1166 = vpop.permute.xlu0 %1165
    %s1168 = sor.u32 256, 8
    %1169 = vbcast.lane.b32.xlu0 %v1163, %s1168
    %v1170 = vpop.permute.xlu0 %1169
    %v1171 = vlaneseq
    %v1172 = vshrl.u32 %v1171, 7
    %v1173 = vsub.s32 2, %v1172
    %v1174 = vrot.slane %v399, %v1173
    %1176 = vbcast.lane.b32.xlu0 %v1174, 256
    %v1177 = vpop.permute.xlu0 %1176
    %s1179 = sor.u32 256, 8
    %1180 = vbcast.lane.b32.xlu0 %v1174, %s1179
    %v1181 = vpop.permute.xlu0 %1180
    %v1182 = vlaneseq
    %v1183 = vshrl.u32 %v1182, 7
    %v1184 = vsub.s32 3, %v1183
    %v1185 = vrot.slane %v399, %v1184
    %1187 = vbcast.lane.b32.xlu0 %v1185, 256
    %v1188 = vpop.permute.xlu0 %1187
    %s1190 = sor.u32 256, 8
    %1191 = vbcast.lane.b32.xlu0 %v1185, %s1190
    %v1192 = vpop.permute.xlu0 %1191
    %v1193 = vadd.f32 %v957, %v1155
    %v1194 = vadd.f32 %v1093, %v1159
    %v1195 = vadd.f32 %v958, %v1166
    %v1196 = vadd.f32 %v1094, %v1170
    %v1197 = vadd.f32 %v959, %v1177
    %v1198 = vadd.f32 %v1095, %v1181
    %v1199 = vadd.f32 %v960, %v1188
    %v1200 = vadd.f32 %v1096, %v1192
    %1209 = vrot.lane.b32.xlu0 %v1193, 64
    %v1210 = vpop.permute.xlu0 %1209
    %1211 = vrot.lane.b32.xlu0 %v1194, 64
    %v1212 = vpop.permute.xlu0 %1211
    %1213 = vrot.lane.b32.xlu0 %v1195, 64
    %v1214 = vpop.permute.xlu0 %1213
    %1215 = vrot.lane.b32.xlu0 %v1196, 64
    %v1216 = vpop.permute.xlu0 %1215
    %1217 = vrot.lane.b32.xlu0 %v1197, 64
    %v1218 = vpop.permute.xlu0 %1217
    %1219 = vrot.lane.b32.xlu0 %v1198, 64
    %v1220 = vpop.permute.xlu0 %1219
    %1221 = vrot.lane.b32.xlu0 %v1199, 64
    %v1222 = vpop.permute.xlu0 %1221
    %1223 = vrot.lane.b32.xlu0 %v1200, 64
    %v1224 = vpop.permute.xlu0 %1223
    %v1233 = vsel %vm210, %v1141, %v1210
    %v1234 = vsel %vm210, %v1142, %v1212
    %v1235 = vsel %vm210, %v1143, %v1214
    %v1236 = vsel %vm210, %v1144, %v1216
    %v1237 = vsel %vm210, %v1145, %v1218
    %v1238 = vsel %vm210, %v1146, %v1220
    %v1239 = vsel %vm210, %v1147, %v1222
    %v1240 = vsel %vm210, %v1148, %v1224
    %v1241 = vmul.f32 %v1233, %v147
    %v1242 = vmul.f32 %v1234, %v152
    %v1243 = vmul.f32 %v1233, %v157
    %v1244 = vmul.f32 %v1234, %v162
    %v1245 = vmul.f32 %v1233, %v167
    %v1246 = vmul.f32 %v1234, %v172
    %v1247 = vmul.f32 %v1233, %v177
    %v1248 = vmul.f32 %v1234, %v182
    %v1249 = vmul.f32 %v1235, %v147
    %v1250 = vmul.f32 %v1236, %v152
    %v1251 = vmul.f32 %v1235, %v157
    %v1252 = vmul.f32 %v1236, %v162
    %v1253 = vmul.f32 %v1235, %v167
    %v1254 = vmul.f32 %v1236, %v172
    %v1255 = vmul.f32 %v1235, %v177
    %v1256 = vmul.f32 %v1236, %v182
    %v1257 = vmul.f32 %v1237, %v147
    %v1258 = vmul.f32 %v1238, %v152
    %v1259 = vmul.f32 %v1237, %v157
    %v1260 = vmul.f32 %v1238, %v162
    %v1261 = vmul.f32 %v1237, %v167
    %v1262 = vmul.f32 %v1238, %v172
    %v1263 = vmul.f32 %v1237, %v177
    %v1264 = vmul.f32 %v1238, %v182
    %v1265 = vmul.f32 %v1239, %v147
    %v1266 = vmul.f32 %v1240, %v152
    %v1267 = vmul.f32 %v1239, %v157
    %v1268 = vmul.f32 %v1240, %v162
    %v1269 = vmul.f32 %v1239, %v167
    %v1270 = vmul.f32 %v1240, %v172
    %v1271 = vmul.f32 %v1239, %v177
    %v1272 = vmul.f32 %v1240, %v182
    %v1273 = vadd.f32 %v1241, %v1242
    %v1274 = vrot.slane %v1273, 4
    %v1275 = vadd.f32 %v1273, %v1274
    %v1276 = vrot.slane %v1275, 2
    %v1277 = vadd.f32 %v1275, %v1276
    %v1278 = vrot.slane %v1277, 1
    %v1279 = vadd.f32 %v1277, %v1278
    %v1280 = vadd.f32 %v1243, %v1244
    %v1281 = vrot.slane %v1280, 4
    %v1282 = vadd.f32 %v1280, %v1281
    %v1283 = vrot.slane %v1282, 2
    %v1284 = vadd.f32 %v1282, %v1283
    %v1285 = vrot.slane %v1284, 1
    %v1286 = vadd.f32 %v1284, %v1285
    %v1287 = vadd.f32 %v1245, %v1246
    %v1288 = vrot.slane %v1287, 4
    %v1289 = vadd.f32 %v1287, %v1288
    %v1290 = vrot.slane %v1289, 2
    %v1291 = vadd.f32 %v1289, %v1290
    %v1292 = vrot.slane %v1291, 1
    %v1293 = vadd.f32 %v1291, %v1292
    %v1294 = vadd.f32 %v1247, %v1248
    %v1295 = vrot.slane %v1294, 4
    %v1296 = vadd.f32 %v1294, %v1295
    %v1297 = vrot.slane %v1296, 2
    %v1298 = vadd.f32 %v1296, %v1297
    %v1299 = vrot.slane %v1298, 1
    %v1300 = vadd.f32 %v1298, %v1299
    %v1301 = vadd.f32 %v1249, %v1250
    %v1302 = vrot.slane %v1301, 4
    %v1303 = vadd.f32 %v1301, %v1302
    %v1304 = vrot.slane %v1303, 2
    %v1305 = vadd.f32 %v1303, %v1304
    %v1306 = vrot.slane %v1305, 1
    %v1307 = vadd.f32 %v1305, %v1306
    %v1308 = vadd.f32 %v1251, %v1252
    %v1309 = vrot.slane %v1308, 4
    %v1310 = vadd.f32 %v1308, %v1309
    %v1311 = vrot.slane %v1310, 2
    %v1312 = vadd.f32 %v1310, %v1311
    %v1313 = vrot.slane %v1312, 1
    %v1314 = vadd.f32 %v1312, %v1313
    %v1315 = vadd.f32 %v1253, %v1254
    %v1316 = vrot.slane %v1315, 4
    %v1317 = vadd.f32 %v1315, %v1316
    %v1318 = vrot.slane %v1317, 2
    %v1319 = vadd.f32 %v1317, %v1318
    %v1320 = vrot.slane %v1319, 1
    %v1321 = vadd.f32 %v1319, %v1320
    %v1322 = vadd.f32 %v1255, %v1256
    %v1323 = vrot.slane %v1322, 4
    %v1324 = vadd.f32 %v1322, %v1323
    %v1325 = vrot.slane %v1324, 2
    %v1326 = vadd.f32 %v1324, %v1325
    %v1327 = vrot.slane %v1326, 1
    %v1328 = vadd.f32 %v1326, %v1327
    %v1329 = vadd.f32 %v1257, %v1258
    %v1330 = vrot.slane %v1329, 4
    %v1331 = vadd.f32 %v1329, %v1330
    %v1332 = vrot.slane %v1331, 2
    %v1333 = vadd.f32 %v1331, %v1332
    %v1334 = vrot.slane %v1333, 1
    %v1335 = vadd.f32 %v1333, %v1334
    %v1336 = vadd.f32 %v1259, %v1260
    %v1337 = vrot.slane %v1336, 4
    %v1338 = vadd.f32 %v1336, %v1337
    %v1339 = vrot.slane %v1338, 2
    %v1340 = vadd.f32 %v1338, %v1339
    %v1341 = vrot.slane %v1340, 1
    %v1342 = vadd.f32 %v1340, %v1341
    %v1343 = vadd.f32 %v1261, %v1262
    %v1344 = vrot.slane %v1343, 4
    %v1345 = vadd.f32 %v1343, %v1344
    %v1346 = vrot.slane %v1345, 2
    %v1347 = vadd.f32 %v1345, %v1346
    %v1348 = vrot.slane %v1347, 1
    %v1349 = vadd.f32 %v1347, %v1348
    %v1350 = vadd.f32 %v1263, %v1264
    %v1351 = vrot.slane %v1350, 4
    %v1352 = vadd.f32 %v1350, %v1351
    %v1353 = vrot.slane %v1352, 2
    %v1354 = vadd.f32 %v1352, %v1353
    %v1355 = vrot.slane %v1354, 1
    %v1356 = vadd.f32 %v1354, %v1355
    %v1357 = vadd.f32 %v1265, %v1266
    %v1358 = vrot.slane %v1357, 4
    %v1359 = vadd.f32 %v1357, %v1358
    %v1360 = vrot.slane %v1359, 2
    %v1361 = vadd.f32 %v1359, %v1360
    %v1362 = vrot.slane %v1361, 1
    %v1363 = vadd.f32 %v1361, %v1362
    %v1364 = vadd.f32 %v1267, %v1268
    %v1365 = vrot.slane %v1364, 4
    %v1366 = vadd.f32 %v1364, %v1365
    %v1367 = vrot.slane %v1366, 2
    %v1368 = vadd.f32 %v1366, %v1367
    %v1369 = vrot.slane %v1368, 1
    %v1370 = vadd.f32 %v1368, %v1369
    %v1371 = vadd.f32 %v1269, %v1270
    %v1372 = vrot.slane %v1371, 4
    %v1373 = vadd.f32 %v1371, %v1372
    %v1374 = vrot.slane %v1373, 2
    %v1375 = vadd.f32 %v1373, %v1374
    %v1376 = vrot.slane %v1375, 1
    %v1377 = vadd.f32 %v1375, %v1376
    %v1378 = vadd.f32 %v1271, %v1272
    %v1379 = vrot.slane %v1378, 4
    %v1380 = vadd.f32 %v1378, %v1379
    %v1381 = vrot.slane %v1380, 2
    %v1382 = vadd.f32 %v1380, %v1381
    %v1383 = vrot.slane %v1382, 1
    %v1384 = vadd.f32 %v1382, %v1383
    %vm1401 = vcmask 1041409
    %v1402 = vsel %vm1401, %v1286, %v1279
    %vm1403 = vcmask 1042434
    %v1404 = vsel %vm1403, %v1293, %v1402
    %vm1405 = vcmask 1043459
    %v1406 = vsel %vm1405, %v1300, %v1404
    %vm1407 = vcmask 1044484
    %v1408 = vsel %vm1407, %v1307, %v1406
    %vm1409 = vcmask 1045509
    %v1410 = vsel %vm1409, %v1314, %v1408
    %vm1411 = vcmask 1046534
    %v1412 = vsel %vm1411, %v1321, %v1410
    %vm1413 = vcmask 1047559
    %v1414 = vsel %vm1413, %v1328, %v1412
    %v1415 = vsel %vm1401, %v1342, %v1335
    %v1416 = vsel %vm1403, %v1349, %v1415
    %v1417 = vsel %vm1405, %v1356, %v1416
    %v1418 = vsel %vm1407, %v1363, %v1417
    %v1419 = vsel %vm1409, %v1370, %v1418
    %v1420 = vsel %vm1411, %v1377, %v1419
    %v1421 = vsel %vm1413, %v1384, %v1420
    %1424 = vst [vmem:[%s3] sm:$0xff] %v1414
    %1425 = vst [vmem:[%s3 + $0x8] sm:$0xff] %v1421
    // Predicated region
    $region18: #{lambda_layer_forward.1} parent=1 // pred_check
      _
    $region19: #{lambda_layer_forward.1} parent=1 // pred_check_branch
      %1427 = sbr.rel (0) target = $region21
    $region20: #{lambda_layer_forward.1} parent=1 // pred_region
      _
    $region21: #{lambda_layer_forward.1} parent=1 // pred_fallthru
      _
    // Predicated region
    $region22: #{lambda_layer_forward.1} parent=1 // pred_check
      _
    $region23: #{lambda_layer_forward.1} parent=1 // pred_check_branch
      %1429 = sbr.rel (0) target = $region25
    $region24: #{lambda_layer_forward.1} parent=1 // pred_region
      _
    $region25: #{lambda_layer_forward.1} parent=1 // pred_fallthru
      _
    %1430 = vsyncpa [#allocation3], 1

</llo_original>
